<compile_context>
chip_gen: v6e
topology: v6e:2x2x1
jax: 0.10.0
libtpu: 0.0.40
codegen_flags: <defaults>
</compile_context>

<pallas_src>
import jax
import jax.numpy as jnp
from jax.experimental import pallas as pl
from jax.experimental.pallas import tpu as pltpu


def _make_concat_head_kernel(num_chunks, batch_block):
    """Kernel closed over the (static) number of input chunks and batch block."""

    def kernel(*refs):
        x_refs = refs[:num_chunks]                     # each (bb, C_i, TN)
        w1_refs = refs[num_chunks:2 * num_chunks]      # each (C, C_i), BN-folded
        b1_ref, w2_ref, b2_ref, o_ref = refs[2 * num_chunks:]

        # Static unroll over the (small) batch block: each iteration is a pair of
        # plain 2-D MXU matmuls, exactly like the single-batch formulation.
        for bi in range(batch_block):
            # SharedMLP layer: Conv1d(C->C, k=1) with the torch.cat fused in as a
            # sum of per-chunk matmuls; BatchNorm1d(eval) + bias folded into W1'/b1'.
            h = jnp.dot(w1_refs[0][...], x_refs[0][bi],
                        preferred_element_type=jnp.float32)
            for xr, wr in zip(x_refs[1:], w1_refs[1:]):
                h = h + jnp.dot(wr[...], xr[bi],
                                preferred_element_type=jnp.float32)
            h = jnp.maximum(h + b1_ref[...], 0.0)       # (C,1) bias bcast, ReLU

            # TODO(synk): Dropout(p) is identity in eval mode; training-mode
            # dropout (pltpu.prng_*) is not implemented here.

            # Head conv: Conv1d(C->2, k=1), no bn / relu.
            y = jnp.dot(w2_ref[...], h, preferred_element_type=jnp.float32)
            o_ref[bi] = (y + b2_ref[...]).astype(o_ref.dtype)   # (2, TN) lane-dense

    return kernel


def _pick_tiles(B, N, c_total, itemsize, *, buffer_budget_bytes=8 << 20,
                max_points_per_step=None, min_steps=4, min_split_bytes=1 << 20):
    """Choose (batch_block, point_tile) for the 2-D grid (B//bb, N//tn)."""
    # Per-step point budget derived from a per-buffer byte budget (x tile dominates).
    cap = buffer_budget_bytes // max(1, c_total * itemsize)
    cap = min(cap, 32768)
    if max_points_per_step is not None:
        cap = min(cap, max_points_per_step)
    cap = max(128, (cap // 128) * 128)

    # Candidate point tiles: multiple-of-128 divisors of N that fit the cap, descending.
    cands = []
    t = (min(cap, N) // 128) * 128
    while t >= 128:
        if N % t == 0:
            cands.append(t)
        t -= 128

    if not cands:
        tn = N          # No multiple-of-128 divisor: single full-N block (correct,
                        # just disables point-axis pipelining).
    else:
        tn = cands[0]   # Biggest tile first: kernel is HBM / step-overhead bound.
        if B * (N // tn) < min_steps:
            # Prefer a still-large tile that leaves >= min_steps grid steps (v7x
            # megacore) as long as each step keeps >= ~1 MiB of DMA.
            for t in cands:
                if (B * (N // t) >= min_steps
                        and t * c_total * itemsize >= min_split_bytes):
                    tn = t
                    break

    # Grow the batch block only while the per-step footprint stays within budget
    # and (when achievable at all) the grid keeps >= min_steps steps.
    bb = 1
    reachable = B * (N // tn) >= min_steps
    for d in range(1, B + 1):
        if B % d:
            continue
        if d * tn > cap:
            break
        if (not reachable) or (B // d) * (N // tn) >= min_steps:
            bb = d
    return bb, tn


def concat_head_forward(x, params, *, out_dtype=jnp.float32,
                        buffer_budget_bytes=8 << 20, max_points_per_step=None):
    """x: (B, C, N) array, or list/tuple of (B, C_i, N) arrays (concat fused).

    Returns (B, 2, N) logits in `out_dtype`.
    """
    chunks = list(x) if isinstance(x, (list, tuple)) else [x]
    w1, b1, bn_scale, bn_shift, w2, b2 = params

    B, _, N = chunks[0].shape
    chunk_c = [c.shape[1] for c in chunks]
    c_total = sum(chunk_c)
    C = w1.shape[0]
    assert w1.shape == (C, c_total), (w1.shape, c_total)
    for c in chunks:
        assert c.shape[0] == B and c.shape[2] == N and c.dtype == chunks[0].dtype

    x_dtype = chunks[0].dtype
    itemsize = jnp.dtype(x_dtype).itemsize

    # Fold BatchNorm (eval) + conv bias into the first conv's weights:
    #   bn(W1 @ x + b1) = (bn_scale[:,None] * W1) @ x + (bn_scale*b1 + bn_shift)
    # W1' is cast to the activation dtype (bf16-native MXU on v6e/v7x); biases and
    # the second conv stay f32, and both dots accumulate in f32.
    w1f = (w1.astype(jnp.float32) * bn_scale[:, None]).astype(x_dtype)   # (C, c_total)
    b1f = (b1 * bn_scale + bn_shift).reshape(C, 1).astype(jnp.float32)   # (C, 1)
    w2f = w2.astype(jnp.float32)                                         # (2, C)
    b2f = b2.reshape(-1, 1).astype(jnp.float32)                          # (2, 1)

    # Split W1' by input-channel chunk so the torch.cat is fused into the kernel.
    w1_splits = []
    off = 0
    for ci in chunk_c:
        w1_splits.append(w1f[:, off:off + ci])
        off += ci

    bb, tn = _pick_tiles(B, N, c_total, itemsize,
                         buffer_budget_bytes=buffer_budget_bytes,
                         max_points_per_step=max_points_per_step)
    grid = (B // bb, N // tn)
    n_steps = grid[0] * grid[1]

    def x_index_map(b, n):
        return (b, 0, n)

    # x inputs: triple-buffer once there are enough steps (compute is near-zero,
    # so the pipeline is back-to-back DMAs).
    x_specs = []
    for ci in chunk_c:
        if n_steps >= 3:
            x_specs.append(pl.BlockSpec((bb, ci, tn), x_index_map,
                                        pipeline_mode=pl.Buffered(3)))
        else:
            x_specs.append(pl.BlockSpec((bb, ci, tn), x_index_map))

    w1_specs = [pl.BlockSpec((C, ci), lambda b, n: (0, 0)) for ci in chunk_c]
    const_specs = [
        pl.BlockSpec((C, 1), lambda b, n: (0, 0)),   # b1' (BN + bias folded)
        pl.BlockSpec((2, C), lambda b, n: (0, 0)),   # W2
        pl.BlockSpec((2, 1), lambda b, n: (0, 0)),   # b2
    ]
    out_spec = pl.BlockSpec((bb, 2, tn), lambda b, n: (b, 0, n))

    # VMEM budget: x buffers dominate; clamp to <= 48 MiB for v7x (64 MiB/TC) headroom.
    n_buf = 3 if n_steps >= 3 else 2
    x_bytes = bb * c_total * tn * itemsize * n_buf
    out_bytes = bb * 2 * tn * jnp.dtype(out_dtype).itemsize * 2
    w_bytes = (C * c_total * itemsize + (C + 2 * C + 2) * 4) * 2
    vmem_limit = int(min(max(x_bytes + out_bytes + w_bytes + (4 << 20),
                             32 << 20), 48 << 20))

    kernel = _make_concat_head_kernel(len(chunks), bb)

    return pl.pallas_call(
        kernel,
        out_shape=jax.ShapeDtypeStruct((B, 2, N), out_dtype),
        grid_spec=pltpu.PrefetchScalarGridSpec(
            num_scalar_prefetch=0,
            grid=grid,
            in_specs=x_specs + w1_specs + const_specs,
            out_specs=out_spec,
        ),
        compiler_params=pltpu.CompilerParams(
            dimension_semantics=("parallel", "parallel"),
            vmem_limit_bytes=vmem_limit,
        ),
    )(*chunks, *w1_splits, b1f, w2f, b2f)


def make_params(key, in_channels):
    """Deterministic xavier-uniform-style init, biases zero, BN at eval defaults."""
    C = in_channels
    k1, k2 = jax.random.split(key)

    def xavier_uniform(k, fan_in, fan_out, shape):
        limit = (6.0 / (fan_in + fan_out)) ** 0.5
        return jax.random.uniform(k, shape, jnp.float32, -limit, limit)

    # Conv1d(C, C, 1): PyTorch weight layout (C_out, C_in) with the k=1 dim squeezed.
    w1 = xavier_uniform(k1, C, C, (C, C))
    b1 = jnp.zeros((C,), jnp.float32)

    # BatchNorm1d eval: gamma=1, beta=0, running_mean=0, running_var=1, eps=1e-5
    eps = 1e-5
    gamma = jnp.ones((C,), jnp.float32)
    beta = jnp.zeros((C,), jnp.float32)
    running_mean = jnp.zeros((C,), jnp.float32)
    running_var = jnp.ones((C,), jnp.float32)
    bn_scale = gamma / jnp.sqrt(running_var + eps)                # (C,)
    bn_shift = beta - running_mean * bn_scale                     # (C,)

    # Conv1d(C, 2, 1): (C_out=2, C_in=C)
    w2 = xavier_uniform(k2, C, 2, (2, C))
    b2 = jnp.zeros((2,), jnp.float32)

    return (w1, b1, bn_scale, bn_shift, w2, b2)


def reference_forward(x_ncl, params):
    """Plain-JAX reference (NCL layout) for correctness checking."""
    w1, b1, bn_scale, bn_shift, w2, b2 = params
    h = jnp.einsum("oc,bcn->bon", w1, x_ncl) + b1[None, :, None]
    h = h * bn_scale[None, :, None] + bn_shift[None, :, None]
    h = jnp.maximum(h, 0.0)
    y = jnp.einsum("oc,bcn->bon", w2, h) + b2[None, :, None]
    return y                                                       # (B, 2, N)


if __name__ == "__main__":
    B, C, N = 2, 32, 512   # batch, in_channels, num points
    key = jax.random.PRNGKey(0)
    kx, kp = jax.random.split(key)

    x = jax.random.normal(kx, (B, C, N), jnp.float32)
    params = make_params(kp, C)
    ref = reference_forward(x, params)

    # 1) Single-tensor input: batch-blocked into one large lane-dense step.
    out = jax.block_until_ready(concat_head_forward(x, params))
    assert out.shape == (B, 2, N), out.shape
    assert jnp.allclose(out, ref, atol=1e-4, rtol=1e-4), "single-input mismatch"

    # 2) List input: the torch.cat(dim=1) is fused into the kernel (per-chunk
    #    BlockSpecs + W1' column slices), no wrapper-side concatenate.
    chunks = [x[:, :20, :], x[:, 20:, :]]
    out2 = jax.block_until_ready(concat_head_forward(chunks, params))
    assert jnp.allclose(out2, ref, atol=1e-4, rtol=1e-4), "fused-concat mismatch"

    # 3) Force a multi-step grid to exercise the pipelined / triple-buffered path.
    out3 = jax.block_until_ready(
        concat_head_forward(x, params, max_points_per_step=128))
    assert jnp.allclose(out3, ref, atol=1e-4, rtol=1e-4), "pipelined-path mismatch"

    # 4) bf16 activations (halves input HBM traffic); accumulation stays f32.
    out_bf16 = jax.block_until_ready(
        concat_head_forward(x.astype(jnp.bfloat16), params))
    assert out_bf16.shape == (B, 2, N), out_bf16.shape

    print("KERNEL_OK")
</pallas_src>

<mosaic_0001>
module attributes {stable_mosaic.version = 11 : i64} {
  func.func @kernel(%arg0: i32, %arg1: i32, %arg2: memref<2x32x512xf32, #tpu.memory_space<vmem>>, %arg3: memref<32x32xf32, #tpu.memory_space<vmem>>, %arg4: memref<32x1xf32, #tpu.memory_space<vmem>>, %arg5: memref<2x32xf32, #tpu.memory_space<vmem>>, %arg6: memref<2x1xf32, #tpu.memory_space<vmem>>, %arg7: memref<2x2x512xf32, #tpu.memory_space<vmem>>) attributes {dimension_semantics = [#tpu.dimension_semantics<parallel>, #tpu.dimension_semantics<parallel>], iteration_bounds = array<i64: 1, 1>, scalar_prefetch = 0 : i64, scratch_operands = 0 : i64, tpu.core_type = #tpu.core_type<tc>, window_params = [{transform_indices = @transform_0, window_bounds = array<i64: 2, 32, 512>}, {pipeline_mode = #tpu.pipeline_mode<synchronous>, transform_indices = @transform_1, window_bounds = array<i64: 32, 32>}, {pipeline_mode = #tpu.pipeline_mode<synchronous>, transform_indices = @transform_2, window_bounds = array<i64: 32, 1>}, {pipeline_mode = #tpu.pipeline_mode<synchronous>, transform_indices = @transform_3, window_bounds = array<i64: 2, 32>}, {pipeline_mode = #tpu.pipeline_mode<synchronous>, transform_indices = @transform_4, window_bounds = array<i64: 2, 1>}, {transform_indices = @transform_5, window_bounds = array<i64: 2, 2, 512>}]} {
    %c0 = arith.constant 0 : index
    %c0_0 = arith.constant 0 : index
    %0 = vector.load %arg3[%c0, %c0_0] : memref<32x32xf32, #tpu.memory_space<vmem>>, vector<32x32xf32>
    %c0_1 = arith.constant 0 : index
    %c0_2 = arith.constant 0 : index
    %c0_3 = arith.constant 0 : index
    %1 = vector.load %arg2[%c0_1, %c0_2, %c0_3] : memref<2x32x512xf32, #tpu.memory_space<vmem>>, vector<1x32x512xf32>
    %2 = vector.shape_cast %1 : vector<1x32x512xf32> to vector<32x512xf32>
    %cst = arith.constant dense<0.000000e+00> : vector<32x512xf32>
    %3 = tpu.matmul %0, %2, %cst {dimension_numbers = #tpu.dot_dimension_numbers<[1], [0], [0], [1], [0, 0, 1, 1], [], []>} : vector<32x32xf32>, vector<32x512xf32>, vector<32x512xf32> -> vector<32x512xf32>
    %c0_4 = arith.constant 0 : index
    %c0_5 = arith.constant 0 : index
    %4 = vector.load %arg4[%c0_4, %c0_5] : memref<32x1xf32, #tpu.memory_space<vmem>>, vector<32x1xf32>
    %5 = vector.broadcast %4 : vector<32x1xf32> to vector<32x512xf32>
    %6 = arith.addf %3, %5 : vector<32x512xf32>
    %cst_6 = arith.constant 0.000000e+00 : f32
    %7 = vector.broadcast %cst_6 : f32 to vector<32x512xf32>
    %8 = arith.maximumf %6, %7 : vector<32x512xf32>
    %c0_7 = arith.constant 0 : index
    %c0_8 = arith.constant 0 : index
    %9 = vector.load %arg5[%c0_7, %c0_8] : memref<2x32xf32, #tpu.memory_space<vmem>>, vector<2x32xf32>
    %cst_9 = arith.constant dense<0.000000e+00> : vector<2x512xf32>
    %10 = tpu.matmul %9, %8, %cst_9 {dimension_numbers = #tpu.dot_dimension_numbers<[1], [0], [0], [1], [0, 0, 1, 1], [], []>} : vector<2x32xf32>, vector<32x512xf32>, vector<2x512xf32> -> vector<2x512xf32>
    %c0_10 = arith.constant 0 : index
    %c0_11 = arith.constant 0 : index
    %11 = vector.load %arg6[%c0_10, %c0_11] : memref<2x1xf32, #tpu.memory_space<vmem>>, vector<2x1xf32>
    %12 = vector.broadcast %11 : vector<2x1xf32> to vector<2x512xf32>
    %13 = arith.addf %10, %12 : vector<2x512xf32>
    %c0_12 = arith.constant 0 : index
    %c0_13 = arith.constant 0 : index
    %c0_14 = arith.constant 0 : index
    %14 = vector.load %arg7[%c0_12, %c0_13, %c0_14] : memref<2x2x512xf32, #tpu.memory_space<vmem>>, vector<1x2x512xf32>
    %15 = vector.shape_cast %14 : vector<1x2x512xf32> to vector<2x512xf32>
    %16 = vector.shape_cast %13 : vector<2x512xf32> to vector<1x2x512xf32>
    tpu.vector_store %arg7[%c0_12, %c0_13, %c0_14], %16 {strides = array<i32>} : memref<2x2x512xf32, #tpu.memory_space<vmem>>, vector<1x2x512xf32>,
    %c0_15 = arith.constant 0 : index
    %c0_16 = arith.constant 0 : index
    %17 = vector.load %arg3[%c0_15, %c0_16] : memref<32x32xf32, #tpu.memory_space<vmem>>, vector<32x32xf32>
    %c1 = arith.constant 1 : index
    %c0_17 = arith.constant 0 : index
    %c0_18 = arith.constant 0 : index
    %18 = vector.load %arg2[%c1, %c0_17, %c0_18] : memref<2x32x512xf32, #tpu.memory_space<vmem>>, vector<1x32x512xf32>
    %19 = vector.shape_cast %18 : vector<1x32x512xf32> to vector<32x512xf32>
    %cst_19 = arith.constant dense<0.000000e+00> : vector<32x512xf32>
    %20 = tpu.matmul %17, %19, %cst_19 {dimension_numbers = #tpu.dot_dimension_numbers<[1], [0], [0], [1], [0, 0, 1, 1], [], []>} : vector<32x32xf32>, vector<32x512xf32>, vector<32x512xf32> -> vector<32x512xf32>
    %c0_20 = arith.constant 0 : index
    %c0_21 = arith.constant 0 : index
    %21 = vector.load %arg4[%c0_20, %c0_21] : memref<32x1xf32, #tpu.memory_space<vmem>>, vector<32x1xf32>
    %22 = vector.broadcast %21 : vector<32x1xf32> to vector<32x512xf32>
    %23 = arith.addf %20, %22 : vector<32x512xf32>
    %cst_22 = arith.constant 0.000000e+00 : f32
    %24 = vector.broadcast %cst_22 : f32 to vector<32x512xf32>
    %25 = arith.maximumf %23, %24 : vector<32x512xf32>
    %c0_23 = arith.constant 0 : index
    %c0_24 = arith.constant 0 : index
    %26 = vector.load %arg5[%c0_23, %c0_24] : memref<2x32xf32, #tpu.memory_space<vmem>>, vector<2x32xf32>
    %cst_25 = arith.constant dense<0.000000e+00> : vector<2x512xf32>
    %27 = tpu.matmul %26, %25, %cst_25 {dimension_numbers = #tpu.dot_dimension_numbers<[1], [0], [0], [1], [0, 0, 1, 1], [], []>} : vector<2x32xf32>, vector<32x512xf32>, vector<2x512xf32> -> vector<2x512xf32>
    %c0_26 = arith.constant 0 : index
    %c0_27 = arith.constant 0 : index
    %28 = vector.load %arg6[%c0_26, %c0_27] : memref<2x1xf32, #tpu.memory_space<vmem>>, vector<2x1xf32>
    %29 = vector.broadcast %28 : vector<2x1xf32> to vector<2x512xf32>
    %30 = arith.addf %27, %29 : vector<2x512xf32>
    %c1_28 = arith.constant 1 : index
    %c0_29 = arith.constant 0 : index
    %c0_30 = arith.constant 0 : index
    %31 = vector.load %arg7[%c1_28, %c0_29, %c0_30] : memref<2x2x512xf32, #tpu.memory_space<vmem>>, vector<1x2x512xf32>
    %32 = vector.shape_cast %31 : vector<1x2x512xf32> to vector<2x512xf32>
    %33 = vector.shape_cast %30 : vector<2x512xf32> to vector<1x2x512xf32>
    tpu.vector_store %arg7[%c1_28, %c0_29, %c0_30], %33 {strides = array<i32>} : memref<2x2x512xf32, #tpu.memory_space<vmem>>, vector<1x2x512xf32>,
    return
  }
  func.func @transform_0(%arg0: i32, %arg1: i32) -> (i32, i32, i32) {
    %c0_i32 = arith.constant 0 : i32
    %c0_i32_0 = arith.constant 0 : i32
    return %arg0, %c0_i32, %arg1 : i32, i32, i32
  }
  func.func @transform_1(%arg0: i32, %arg1: i32) -> (i32, i32) {
    %c0_i32 = arith.constant 0 : i32
    %c0_i32_0 = arith.constant 0 : i32
    %c0_i32_1 = arith.constant 0 : i32
    return %c0_i32, %c0_i32_0 : i32, i32
  }
  func.func @transform_2(%arg0: i32, %arg1: i32) -> (i32, i32) {
    %c0_i32 = arith.constant 0 : i32
    %c0_i32_0 = arith.constant 0 : i32
    %c0_i32_1 = arith.constant 0 : i32
    return %c0_i32, %c0_i32_0 : i32, i32
  }
  func.func @transform_3(%arg0: i32, %arg1: i32) -> (i32, i32) {
    %c0_i32 = arith.constant 0 : i32
    %c0_i32_0 = arith.constant 0 : i32
    %c0_i32_1 = arith.constant 0 : i32
    return %c0_i32, %c0_i32_0 : i32, i32
  }
  func.func @transform_4(%arg0: i32, %arg1: i32) -> (i32, i32) {
    %c0_i32 = arith.constant 0 : i32
    %c0_i32_0 = arith.constant 0 : i32
    %c0_i32_1 = arith.constant 0 : i32
    return %c0_i32, %c0_i32_0 : i32, i32
  }
  func.func @transform_5(%arg0: i32, %arg1: i32) -> (i32, i32, i32) {
    %c0_i32 = arith.constant 0 : i32
    %c0_i32_0 = arith.constant 0 : i32
    return %arg0, %c0_i32, %arg1 : i32, i32, i32
  }
}

</mosaic_0001>

<llo_original>
// kernel: tpu_custom_call.1
$region0: #{tpu_custom_call.1}
  #allocation0 [shape = 'u32[]', space=smem, size = 0x4, offset = 0x4, fixed_abs, tag = 'smem constant byte address 0x4 - core index']
  #allocation1 [shape = 'u32[144,128]{1,0:T(1,128)}', space=vmem, size = 0x12000, scoped, tag = 'internal scratch']
  %s0 = inlined_call_operand.hbm [shape: f32[2,32,512], index: 0, kind: input, shape index: {}]
  %s1 = inlined_call_operand.vmem [shape: f32[32,32], index: 1, kind: input, shape index: {}]
  %s2 = inlined_call_operand.vmem [shape: f32[32,1], index: 2, kind: input, shape index: {}]
  %s3 = inlined_call_operand.vmem [shape: f32[2,32], index: 3, kind: input, shape index: {}]
  %s4 = inlined_call_operand.vmem [shape: f32[2,1], index: 4, kind: input, shape index: {}]
  %s5 = inlined_call_operand.hbm [shape: f32[2,2,512], index: 5, kind: output, shape index: {}]
  %s6 = sld [smem:[#allocation0]]
  $region34: #{tpu_custom_call.1} parent=0
    _
  %s8 = ssub.s32 1, %s6
  %s9 = scalar_select 0, %s8, %s6
  $region1: #{tpu_custom_call.1} parent=0
    #allocation2 [shape = 'u8[131072]{0}', space=vmem, size = 0x20000, scoped, tag = 'input window, operand 0, single buffered']
    #allocation3 [shape = 's32[1]{0}', space=sflag, size = 0x4, scoped, tag = 'scoped memory for tpu_custom_call.1']
    #allocation4 [shape = 's32[1]{0}', space=sflag, size = 0x4, scoped, tag = 'scoped memory for tpu_custom_call.1']
    #allocation5 [shape = 'u8[8192]{0}', space=vmem, size = 0x2000, scoped, tag = 'output window, operand 0, single buffered']
    %10 = vsyncpa [#allocation3], 0
    %11 = vsyncpa [#allocation4], 0
    // Predicated region
    $region2: #{tpu_custom_call.1} parent=1 // pred_check
      _
    $region3: #{tpu_custom_call.1} parent=1 // pred_check_branch
      %13 = sbr.rel (0) target = $region5
    $region4: #{tpu_custom_call.1} parent=1 // pred_region
      %s15 = ssub.s32 4096, 4096
      %16 = vsyncadd [#allocation3], %s15
      %s17 = sshll.u32 [#allocation2], 4
      %s18 = int_to_ptr.vmem [resolvable:$true] %s17
      %23 = dma.hbm_to_vmem [thread:$0]  %s0, 4096, %s18, [#allocation3], 512, 512, 32
    $region5: #{tpu_custom_call.1} parent=1 // pred_fallthru
      _
    // Predicated region
    $region6: #{tpu_custom_call.1} parent=1 // pred_check
      _
    $region7: #{tpu_custom_call.1} parent=1 // pred_check_branch
      %25 = sbr.rel (0) target = $region9
    $region8: #{tpu_custom_call.1} parent=1 // pred_region
      _
    $region9: #{tpu_custom_call.1} parent=1 // pred_fallthru
      _
    // Predicated region
    $region10: #{tpu_custom_call.1} parent=1 // pred_check
      _
    $region11: #{tpu_custom_call.1} parent=1 // pred_check_branch
      %27 = sbr.rel (0) target = $region13
    $region12: #{tpu_custom_call.1} parent=1 // pred_region
      _
    $region13: #{tpu_custom_call.1} parent=1 // pred_fallthru
      _
    // Predicated region
    $region14: #{tpu_custom_call.1} parent=1 // pred_check
      _
    $region15: #{tpu_custom_call.1} parent=1 // pred_check_branch
      %29 = sbr.rel (0) target = $region17
    $region16: #{tpu_custom_call.1} parent=1 // pred_region
      _
    $region17: #{tpu_custom_call.1} parent=1 // pred_fallthru
      _
    // Predicated region
    $region18: #{tpu_custom_call.1} parent=1 // pred_check
      _
    $region19: #{tpu_custom_call.1} parent=1 // pred_check_branch
      %31 = sbr.rel (0) target = $region21
    $region20: #{tpu_custom_call.1} parent=1 // pred_region
      _
    $region21: #{tpu_custom_call.1} parent=1 // pred_fallthru
      _
    // Predicated region
    $region22: #{tpu_custom_call.1} parent=1 // pred_check
      _
    $region23: #{tpu_custom_call.1} parent=1 // pred_check_branch
      %33 = sbr.rel (0) target = $region25
    $region24: #{tpu_custom_call.1} parent=1 // pred_region
      %34 = dma.done [#allocation3], 4096
    $region25: #{tpu_custom_call.1} parent=1 // pred_fallthru
      _
    %v35 = vld [vmem:[%s1] sm:$0xff]
    %v36 = vld [vmem:[%s1 + $0x8] sm:$0xff]
    %v37 = vld [vmem:[%s1 + $0x10] sm:$0xff]
    %v38 = vld [vmem:[%s1 + $0x18] sm:$0xff]
    %v39 = vld [vmem:[#allocation2] sm:$0xff]
    %v40 = vld [vmem:[#allocation2 + $0x8] sm:$0xff]
    %v41 = vld [vmem:[#allocation2 + $0x10] sm:$0xff]
    %v42 = vld [vmem:[#allocation2 + $0x18] sm:$0xff]
    %v43 = vld [vmem:[#allocation2 + $0x20] sm:$0xff]
    %v44 = vld [vmem:[#allocation2 + $0x28] sm:$0xff]
    %v45 = vld [vmem:[#allocation2 + $0x30] sm:$0xff]
    %v46 = vld [vmem:[#allocation2 + $0x38] sm:$0xff]
    %v47 = vld [vmem:[#allocation2 + $0x40] sm:$0xff]
    %v48 = vld [vmem:[#allocation2 + $0x48] sm:$0xff]
    %v49 = vld [vmem:[#allocation2 + $0x50] sm:$0xff]
    %v50 = vld [vmem:[#allocation2 + $0x58] sm:$0xff]
    %v51 = vld [vmem:[#allocation2 + $0x60] sm:$0xff]
    %v52 = vld [vmem:[#allocation2 + $0x68] sm:$0xff]
    %v53 = vld [vmem:[#allocation2 + $0x70] sm:$0xff]
    %v54 = vld [vmem:[#allocation2 + $0x78] sm:$0xff]
    %v55 = vld [vmem:[%s2] sm:$0xff]
    %v56 = vld [vmem:[%s2 + $0x8] sm:$0xff]
    %v57 = vld [vmem:[%s2 + $0x10] sm:$0xff]
    %v58 = vld [vmem:[%s2 + $0x18] sm:$0xff]
    %60 = vset.pattern.permute.xlu0 0
    %61 = vperm.xlu0 %60, %v55
    %v62 = vpop.permute.xlu0 %61
    %65 = vset.pattern.permute.xlu0 0
    %66 = vperm.xlu0 %65, %v56
    %v67 = vpop.permute.xlu0 %66
    %70 = vset.pattern.permute.xlu0 0
    %71 = vperm.xlu0 %70, %v57
    %v72 = vpop.permute.xlu0 %71
    %75 = vset.pattern.permute.xlu0 0
    %76 = vperm.xlu0 %75, %v58
    %v77 = vpop.permute.xlu0 %76
    %vm79 = vcmask 261120
    %v81 = vsel %vm79, %v35, 0
    %v84 = vsel %vm79, %v36, 0
    %v87 = vsel %vm79, %v37, 0
    %v90 = vsel %vm79, %v38, 0
    %92 = vmatprep.subr.mxu0 0.0
    %93 = vmatpush1.msra.mxu0 0.0
    %94 = vmatprep.subr.mxu0 0.0
    %95 = vmatpush1.msra.mxu0 0.0
    %96 = vmatprep.subr.mxu0 0.0
    %97 = vmatpush1.msra.mxu0 0.0
    %98 = vmatprep.subr.mxu0 0.0
    %99 = vmatpush1.msra.mxu0 0.0
    %100 = vmatprep.subr.mxu0 0.0
    %101 = vmatpush1.msra.mxu0 0.0
    %102 = vmatprep.subr.mxu0 0.0
    %103 = vmatpush1.msra.mxu0 0.0
    %104 = vmatprep.subr.mxu0 0.0
    %105 = vmatpush1.msra.mxu0 0.0
    %106 = vmatprep.subr.mxu0 0.0
    %107 = vmatpush1.msra.mxu0 0.0
    %108 = vmatprep.subr.mxu0 0.0
    %109 = vmatpush1.msra.mxu0 0.0
    %110 = vmatprep.subr.mxu0 0.0
    %111 = vmatpush1.msra.mxu0 0.0
    %112 = vmatprep.subr.mxu0 0.0
    %113 = vmatpush1.msra.mxu0 0.0
    %114 = vmatprep.subr.mxu0 0.0
    %115 = vmatpush1.msra.mxu0 0.0
    %116 = vmatprep.subr.mxu0 %v52
    %117 = vmatpush1.msra.mxu0 %v51
    %118 = vmatprep.subr.mxu0 %v48
    %119 = vmatpush1.msra.mxu0 %v47
    %120 = vmatprep.subr.mxu0 %v44
    %121 = vmatpush1.msra.mxu0 %v43
    %122 = vmatprep.subr.mxu0 %v40
    %123 = vmatpush1.msra.mxu0 %v39
    %124 = vmatprep.subr.mxu0 0.0
    %125 = vmatpush2.msra.mxu0 0.0
    %126 = vmatprep.subr.mxu0 0.0
    %127 = vmatpush2.msra.mxu0 0.0
    %128 = vmatprep.subr.mxu0 0.0
    %129 = vmatpush2.msra.mxu0 0.0
    %130 = vmatprep.subr.mxu0 0.0
    %131 = vmatpush2.msra.mxu0 0.0
    %132 = vmatprep.subr.mxu0 0.0
    %133 = vmatpush2.msra.mxu0 0.0
    %134 = vmatprep.subr.mxu0 0.0
    %135 = vmatpush2.msra.mxu0 0.0
    %136 = vmatprep.subr.mxu0 0.0
    %137 = vmatpush2.msra.mxu0 0.0
    %138 = vmatprep.subr.mxu0 0.0
    %139 = vmatpush2.msra.mxu0 0.0
    %140 = vmatprep.subr.mxu0 0.0
    %141 = vmatpush2.msra.mxu0 0.0
    %142 = vmatprep.subr.mxu0 0.0
    %143 = vmatpush2.msra.mxu0 0.0
    %144 = vmatprep.subr.mxu0 0.0
    %145 = vmatpush2.msra.mxu0 0.0
    %146 = vmatprep.subr.mxu0 0.0
    %147 = vmatpush2.msra.mxu0 0.0
    %148 = vmatprep.subr.mxu0 0.0
    %149 = vmatpush2.msra.mxu0 0.0
    %150 = vmatprep.subr.mxu0 0.0
    %151 = vmatpush2.msra.mxu0 0.0
    %152 = vmatprep.subr.mxu0 0.0
    %153 = vmatpush2.msra.mxu0 0.0
    %154 = vmatprep.subr.mxu0 0.0
    %155 = vmatpush2.msra.mxu0 0.0
    %156 = vmatprep.mubr.f32.mxu0 0.0
    %157 = vmatmul.mubr.f32.gmra.mxu0 %v81
    %v158 = vpop.f32.mrf.mxu0
    %v159 = vadd.f32 %v62, %v158
    %v160 = vpop.f32.mrf.mxu0
    %v161 = vadd.f32 %v62, %v160
    %162 = vmatprep.mubr.f32.mxu0 0.0
    %163 = vmatmul.mubr.f32.gmra.mxu0 %v84
    %v164 = vpop.f32.mrf.mxu0
    %v165 = vadd.f32 %v67, %v164
    %v166 = vpop.f32.mrf.mxu0
    %v167 = vadd.f32 %v67, %v166
    %168 = vmatprep.mubr.f32.mxu0 0.0
    %169 = vmatmul.mubr.f32.gmra.mxu0 %v87
    %v170 = vpop.f32.mrf.mxu0
    %v171 = vadd.f32 %v72, %v170
    %v172 = vpop.f32.mrf.mxu0
    %v173 = vadd.f32 %v72, %v172
    %174 = vmatprep.mubr.f32.mxu0 0.0
    %175 = vmatmul.mubr.f32.gmra.mxu0 %v90
    %v176 = vpop.f32.mrf.mxu0
    %v177 = vadd.f32 %v77, %v176
    %v178 = vpop.f32.mrf.mxu0
    %v179 = vadd.f32 %v77, %v178
    %180 = vdwg.mxu0
    %181 = vmatprep.subr.mxu0 0.0
    %182 = vmatpush1.msra.mxu0 0.0
    %183 = vmatprep.subr.mxu0 0.0
    %184 = vmatpush1.msra.mxu0 0.0
    %185 = vmatprep.subr.mxu0 0.0
    %186 = vmatpush1.msra.mxu0 0.0
    %187 = vmatprep.subr.mxu0 0.0
    %188 = vmatpush1.msra.mxu0 0.0
    %189 = vmatprep.subr.mxu0 0.0
    %190 = vmatpush1.msra.mxu0 0.0
    %191 = vmatprep.subr.mxu0 0.0
    %192 = vmatpush1.msra.mxu0 0.0
    %193 = vmatprep.subr.mxu0 0.0
    %194 = vmatpush1.msra.mxu0 0.0
    %195 = vmatprep.subr.mxu0 0.0
    %196 = vmatpush1.msra.mxu0 0.0
    %197 = vmatprep.subr.mxu0 0.0
    %198 = vmatpush1.msra.mxu0 0.0
    %199 = vmatprep.subr.mxu0 0.0
    %200 = vmatpush1.msra.mxu0 0.0
    %201 = vmatprep.subr.mxu0 0.0
    %202 = vmatpush1.msra.mxu0 0.0
    %203 = vmatprep.subr.mxu0 0.0
    %204 = vmatpush1.msra.mxu0 0.0
    %205 = vmatprep.subr.mxu0 %v54
    %206 = vmatpush1.msra.mxu0 %v53
    %207 = vmatprep.subr.mxu0 %v50
    %208 = vmatpush1.msra.mxu0 %v49
    %209 = vmatprep.subr.mxu0 %v46
    %210 = vmatpush1.msra.mxu0 %v45
    %211 = vmatprep.subr.mxu0 %v42
    %212 = vmatpush1.msra.mxu0 %v41
    %213 = vmatprep.subr.mxu0 0.0
    %214 = vmatpush2.msra.mxu0 0.0
    %215 = vmatprep.subr.mxu0 0.0
    %216 = vmatpush2.msra.mxu0 0.0
    %217 = vmatprep.subr.mxu0 0.0
    %218 = vmatpush2.msra.mxu0 0.0
    %219 = vmatprep.subr.mxu0 0.0
    %220 = vmatpush2.msra.mxu0 0.0
    %221 = vmatprep.subr.mxu0 0.0
    %222 = vmatpush2.msra.mxu0 0.0
    %223 = vmatprep.subr.mxu0 0.0
    %224 = vmatpush2.msra.mxu0 0.0
    %225 = vmatprep.subr.mxu0 0.0
    %226 = vmatpush2.msra.mxu0 0.0
    %227 = vmatprep.subr.mxu0 0.0
    %228 = vmatpush2.msra.mxu0 0.0
    %229 = vmatprep.subr.mxu0 0.0
    %230 = vmatpush2.msra.mxu0 0.0
    %231 = vmatprep.subr.mxu0 0.0
    %232 = vmatpush2.msra.mxu0 0.0
    %233 = vmatprep.subr.mxu0 0.0
    %234 = vmatpush2.msra.mxu0 0.0
    %235 = vmatprep.subr.mxu0 0.0
    %236 = vmatpush2.msra.mxu0 0.0
    %237 = vmatprep.subr.mxu0 0.0
    %238 = vmatpush2.msra.mxu0 0.0
    %239 = vmatprep.subr.mxu0 0.0
    %240 = vmatpush2.msra.mxu0 0.0
    %241 = vmatprep.subr.mxu0 0.0
    %242 = vmatpush2.msra.mxu0 0.0
    %243 = vmatprep.subr.mxu0 0.0
    %244 = vmatpush2.msra.mxu0 0.0
    %245 = vmatprep.mubr.f32.mxu0 0.0
    %246 = vmatmul.mubr.f32.gmra.mxu0 %v81
    %v247 = vpop.f32.mrf.mxu0
    %v248 = vadd.f32 %v62, %v247
    %v249 = vpop.f32.mrf.mxu0
    %v250 = vadd.f32 %v62, %v249
    %251 = vmatprep.mubr.f32.mxu0 0.0
    %252 = vmatmul.mubr.f32.gmra.mxu0 %v84
    %v253 = vpop.f32.mrf.mxu0
    %v254 = vadd.f32 %v67, %v253
    %v255 = vpop.f32.mrf.mxu0
    %v256 = vadd.f32 %v67, %v255
    %257 = vmatprep.mubr.f32.mxu0 0.0
    %258 = vmatmul.mubr.f32.gmra.mxu0 %v87
    %v259 = vpop.f32.mrf.mxu0
    %v260 = vadd.f32 %v72, %v259
    %v261 = vpop.f32.mrf.mxu0
    %v262 = vadd.f32 %v72, %v261
    %263 = vmatprep.mubr.f32.mxu0 0.0
    %264 = vmatmul.mubr.f32.gmra.mxu0 %v90
    %v265 = vpop.f32.mrf.mxu0
    %v266 = vadd.f32 %v77, %v265
    %v267 = vpop.f32.mrf.mxu0
    %v268 = vadd.f32 %v77, %v267
    %269 = vdwg.mxu0
    %v270 = vmax.f32 %v159, 0.0
    %v271 = vmax.f32 %v161, 0.0
    %v272 = vmax.f32 %v248, 0.0
    %v273 = vmax.f32 %v250, 0.0
    %v274 = vmax.f32 %v165, 0.0
    %v275 = vmax.f32 %v167, 0.0
    %v276 = vmax.f32 %v254, 0.0
    %v277 = vmax.f32 %v256, 0.0
    %v278 = vmax.f32 %v171, 0.0
    %v279 = vmax.f32 %v173, 0.0
    %v280 = vmax.f32 %v260, 0.0
    %v281 = vmax.f32 %v262, 0.0
    %v282 = vmax.f32 %v177, 0.0
    %v283 = vmax.f32 %v179, 0.0
    %v284 = vmax.f32 %v266, 0.0
    %v285 = vmax.f32 %v268, 0.0
    %v286 = vld [vmem:[%s3] sm:$0x3]
    %v287 = vld [vmem:[%s4] sm:$0x3]
    %289 = vset.pattern.permute.xlu0 0
    %290 = vperm.xlu0 %289, %v287
    %v291 = vpop.permute.xlu0 %290
    %v294 = vsel %vm79, %v286, 0
    %296 = vmatprep.subr.mxu0 0.0
    %297 = vmatpush1.msra.mxu0 0.0
    %298 = vmatprep.subr.mxu0 0.0
    %299 = vmatpush1.msra.mxu0 0.0
    %300 = vmatprep.subr.mxu0 0.0
    %301 = vmatpush1.msra.mxu0 0.0
    %302 = vmatprep.subr.mxu0 0.0
    %303 = vmatpush1.msra.mxu0 0.0
    %304 = vmatprep.subr.mxu0 0.0
    %305 = vmatpush1.msra.mxu0 0.0
    %306 = vmatprep.subr.mxu0 0.0
    %307 = vmatpush1.msra.mxu0 0.0
    %308 = vmatprep.subr.mxu0 0.0
    %309 = vmatpush1.msra.mxu0 0.0
    %310 = vmatprep.subr.mxu0 0.0
    %311 = vmatpush1.msra.mxu0 0.0
    %312 = vmatprep.subr.mxu0 0.0
    %313 = vmatpush1.msra.mxu0 0.0
    %314 = vmatprep.subr.mxu0 0.0
    %315 = vmatpush1.msra.mxu0 0.0
    %316 = vmatprep.subr.mxu0 0.0
    %317 = vmatpush1.msra.mxu0 0.0
    %318 = vmatprep.subr.mxu0 0.0
    %319 = vmatpush1.msra.mxu0 0.0
    %320 = vmatprep.subr.mxu0 %v283
    %321 = vmatpush1.msra.mxu0 %v282
    %322 = vmatprep.subr.mxu0 %v279
    %323 = vmatpush1.msra.mxu0 %v278
    %324 = vmatprep.subr.mxu0 %v275
    %325 = vmatpush1.msra.mxu0 %v274
    %326 = vmatprep.subr.mxu0 %v271
    %327 = vmatpush1.msra.mxu0 %v270
    %328 = vmatprep.subr.mxu0 0.0
    %329 = vmatpush2.msra.mxu0 0.0
    %330 = vmatprep.subr.mxu0 0.0
    %331 = vmatpush2.msra.mxu0 0.0
    %332 = vmatprep.subr.mxu0 0.0
    %333 = vmatpush2.msra.mxu0 0.0
    %334 = vmatprep.subr.mxu0 0.0
    %335 = vmatpush2.msra.mxu0 0.0
    %336 = vmatprep.subr.mxu0 0.0
    %337 = vmatpush2.msra.mxu0 0.0
    %338 = vmatprep.subr.mxu0 0.0
    %339 = vmatpush2.msra.mxu0 0.0
    %340 = vmatprep.subr.mxu0 0.0
    %341 = vmatpush2.msra.mxu0 0.0
    %342 = vmatprep.subr.mxu0 0.0
    %343 = vmatpush2.msra.mxu0 0.0
    %344 = vmatprep.subr.mxu0 0.0
    %345 = vmatpush2.msra.mxu0 0.0
    %346 = vmatprep.subr.mxu0 0.0
    %347 = vmatpush2.msra.mxu0 0.0
    %348 = vmatprep.subr.mxu0 0.0
    %349 = vmatpush2.msra.mxu0 0.0
    %350 = vmatprep.subr.mxu0 0.0
    %351 = vmatpush2.msra.mxu0 0.0
    %352 = vmatprep.subr.mxu0 0.0
    %353 = vmatpush2.msra.mxu0 0.0
    %354 = vmatprep.subr.mxu0 0.0
    %355 = vmatpush2.msra.mxu0 0.0
    %356 = vmatprep.subr.mxu0 0.0
    %357 = vmatpush2.msra.mxu0 0.0
    %358 = vmatprep.subr.mxu0 0.0
    %359 = vmatpush2.msra.mxu0 0.0
    %360 = vmatprep.mubr.f32.mxu0 0.0
    %361 = vmatmul.mubr.f32.gmra.mxu0 %v294
    %v362 = vpop.f32.mrf.mxu0
    %v363 = vadd.f32 %v291, %v362
    %v364 = vpop.f32.mrf.mxu0
    %v365 = vadd.f32 %v291, %v364
    %366 = vdwg.mxu0
    %367 = vmatprep.subr.mxu0 0.0
    %368 = vmatpush1.msra.mxu0 0.0
    %369 = vmatprep.subr.mxu0 0.0
    %370 = vmatpush1.msra.mxu0 0.0
    %371 = vmatprep.subr.mxu0 0.0
    %372 = vmatpush1.msra.mxu0 0.0
    %373 = vmatprep.subr.mxu0 0.0
    %374 = vmatpush1.msra.mxu0 0.0
    %375 = vmatprep.subr.mxu0 0.0
    %376 = vmatpush1.msra.mxu0 0.0
    %377 = vmatprep.subr.mxu0 0.0
    %378 = vmatpush1.msra.mxu0 0.0
    %379 = vmatprep.subr.mxu0 0.0
    %380 = vmatpush1.msra.mxu0 0.0
    %381 = vmatprep.subr.mxu0 0.0
    %382 = vmatpush1.msra.mxu0 0.0
    %383 = vmatprep.subr.mxu0 0.0
    %384 = vmatpush1.msra.mxu0 0.0
    %385 = vmatprep.subr.mxu0 0.0
    %386 = vmatpush1.msra.mxu0 0.0
    %387 = vmatprep.subr.mxu0 0.0
    %388 = vmatpush1.msra.mxu0 0.0
    %389 = vmatprep.subr.mxu0 0.0
    %390 = vmatpush1.msra.mxu0 0.0
    %391 = vmatprep.subr.mxu0 %v285
    %392 = vmatpush1.msra.mxu0 %v284
    %393 = vmatprep.subr.mxu0 %v281
    %394 = vmatpush1.msra.mxu0 %v280
    %395 = vmatprep.subr.mxu0 %v277
    %396 = vmatpush1.msra.mxu0 %v276
    %397 = vmatprep.subr.mxu0 %v273
    %398 = vmatpush1.msra.mxu0 %v272
    %399 = vmatprep.subr.mxu0 0.0
    %400 = vmatpush2.msra.mxu0 0.0
    %401 = vmatprep.subr.mxu0 0.0
    %402 = vmatpush2.msra.mxu0 0.0
    %403 = vmatprep.subr.mxu0 0.0
    %404 = vmatpush2.msra.mxu0 0.0
    %405 = vmatprep.subr.mxu0 0.0
    %406 = vmatpush2.msra.mxu0 0.0
    %407 = vmatprep.subr.mxu0 0.0
    %408 = vmatpush2.msra.mxu0 0.0
    %409 = vmatprep.subr.mxu0 0.0
    %410 = vmatpush2.msra.mxu0 0.0
    %411 = vmatprep.subr.mxu0 0.0
    %412 = vmatpush2.msra.mxu0 0.0
    %413 = vmatprep.subr.mxu0 0.0
    %414 = vmatpush2.msra.mxu0 0.0
    %415 = vmatprep.subr.mxu0 0.0
    %416 = vmatpush2.msra.mxu0 0.0
    %417 = vmatprep.subr.mxu0 0.0
    %418 = vmatpush2.msra.mxu0 0.0
    %419 = vmatprep.subr.mxu0 0.0
    %420 = vmatpush2.msra.mxu0 0.0
    %421 = vmatprep.subr.mxu0 0.0
    %422 = vmatpush2.msra.mxu0 0.0
    %423 = vmatprep.subr.mxu0 0.0
    %424 = vmatpush2.msra.mxu0 0.0
    %425 = vmatprep.subr.mxu0 0.0
    %426 = vmatpush2.msra.mxu0 0.0
    %427 = vmatprep.subr.mxu0 0.0
    %428 = vmatpush2.msra.mxu0 0.0
    %429 = vmatprep.subr.mxu0 0.0
    %430 = vmatpush2.msra.mxu0 0.0
    %431 = vmatprep.mubr.f32.mxu0 0.0
    %432 = vmatmul.mubr.f32.gmra.mxu0 %v294
    %v433 = vpop.f32.mrf.mxu0
    %v434 = vadd.f32 %v291, %v433
    %v435 = vpop.f32.mrf.mxu0
    %v436 = vadd.f32 %v291, %v435
    %437 = vdwg.mxu0
    %v442 = vcombine.low %v363, %v365
    %v443 = vcombine.low %v434, %v436
    %v445 = vunpack.c.l.s4 1983009808
    %v446 = vunpack.c.0.s8 %v445
    %v447 = vlaneseq
    %v448 = vshrl.u32 %v447, 7
    %v449 = vsub.s32 %v446, %v448
    %v450 = vrot.slane %v442, %v449
    %v452 = vunpack.c.l.s4 1983009808
    %v453 = vunpack.c.0.s8 %v452
    %v454 = vlaneseq
    %v455 = vshrl.u32 %v454, 7
    %v456 = vsub.s32 %v453, %v455
    %v457 = vrot.slane %v443, %v456
    %v458 = vcombine.low %v450, %v457
    %460 = vst [vmem:[#allocation5] sm:$0xff] %v458
    %v461 = vld [vmem:[%s1] sm:$0xff]
    %v462 = vld [vmem:[%s1 + $0x8] sm:$0xff]
    %v463 = vld [vmem:[%s1 + $0x10] sm:$0xff]
    %v464 = vld [vmem:[%s1 + $0x18] sm:$0xff]
    %s465 = scalar_lea.vmem [#allocation2], 128
    %v466 = vld [vmem:[%s465] sm:$0xff]
    %v467 = vld [vmem:[%s465 + $0x8] sm:$0xff]
    %v468 = vld [vmem:[%s465 + $0x10] sm:$0xff]
    %v469 = vld [vmem:[%s465 + $0x18] sm:$0xff]
    %v470 = vld [vmem:[%s465 + $0x20] sm:$0xff]
    %v471 = vld [vmem:[%s465 + $0x28] sm:$0xff]
    %v472 = vld [vmem:[%s465 + $0x30] sm:$0xff]
    %v473 = vld [vmem:[%s465 + $0x38] sm:$0xff]
    %v474 = vld [vmem:[%s465 + $0x40] sm:$0xff]
    %v475 = vld [vmem:[%s465 + $0x48] sm:$0xff]
    %v476 = vld [vmem:[%s465 + $0x50] sm:$0xff]
    %v477 = vld [vmem:[%s465 + $0x58] sm:$0xff]
    %v478 = vld [vmem:[%s465 + $0x60] sm:$0xff]
    %v479 = vld [vmem:[%s465 + $0x68] sm:$0xff]
    %v480 = vld [vmem:[%s465 + $0x70] sm:$0xff]
    %v481 = vld [vmem:[%s465 + $0x78] sm:$0xff]
    %v482 = vld [vmem:[%s2] sm:$0xff]
    %v483 = vld [vmem:[%s2 + $0x8] sm:$0xff]
    %v484 = vld [vmem:[%s2 + $0x10] sm:$0xff]
    %v485 = vld [vmem:[%s2 + $0x18] sm:$0xff]
    %487 = vset.pattern.permute.xlu0 0
    %488 = vperm.xlu0 %487, %v482
    %v489 = vpop.permute.xlu0 %488
    %492 = vset.pattern.permute.xlu0 0
    %493 = vperm.xlu0 %492, %v483
    %v494 = vpop.permute.xlu0 %493
    %497 = vset.pattern.permute.xlu0 0
    %498 = vperm.xlu0 %497, %v484
    %v499 = vpop.permute.xlu0 %498
    %502 = vset.pattern.permute.xlu0 0
    %503 = vperm.xlu0 %502, %v485
    %v504 = vpop.permute.xlu0 %503
    %v507 = vsel %vm79, %v461, 0
    %v510 = vsel %vm79, %v462, 0
    %v513 = vsel %vm79, %v463, 0
    %v516 = vsel %vm79, %v464, 0
    %518 = vmatprep.subr.mxu0 0.0
    %519 = vmatpush1.msra.mxu0 0.0
    %520 = vmatprep.subr.mxu0 0.0
    %521 = vmatpush1.msra.mxu0 0.0
    %522 = vmatprep.subr.mxu0 0.0
    %523 = vmatpush1.msra.mxu0 0.0
    %524 = vmatprep.subr.mxu0 0.0
    %525 = vmatpush1.msra.mxu0 0.0
    %526 = vmatprep.subr.mxu0 0.0
    %527 = vmatpush1.msra.mxu0 0.0
    %528 = vmatprep.subr.mxu0 0.0
    %529 = vmatpush1.msra.mxu0 0.0
    %530 = vmatprep.subr.mxu0 0.0
    %531 = vmatpush1.msra.mxu0 0.0
    %532 = vmatprep.subr.mxu0 0.0
    %533 = vmatpush1.msra.mxu0 0.0
    %534 = vmatprep.subr.mxu0 0.0
    %535 = vmatpush1.msra.mxu0 0.0
    %536 = vmatprep.subr.mxu0 0.0
    %537 = vmatpush1.msra.mxu0 0.0
    %538 = vmatprep.subr.mxu0 0.0
    %539 = vmatpush1.msra.mxu0 0.0
    %540 = vmatprep.subr.mxu0 0.0
    %541 = vmatpush1.msra.mxu0 0.0
    %542 = vmatprep.subr.mxu0 %v479
    %543 = vmatpush1.msra.mxu0 %v478
    %544 = vmatprep.subr.mxu0 %v475
    %545 = vmatpush1.msra.mxu0 %v474
    %546 = vmatprep.subr.mxu0 %v471
    %547 = vmatpush1.msra.mxu0 %v470
    %548 = vmatprep.subr.mxu0 %v467
    %549 = vmatpush1.msra.mxu0 %v466
    %550 = vmatprep.subr.mxu0 0.0
    %551 = vmatpush2.msra.mxu0 0.0
    %552 = vmatprep.subr.mxu0 0.0
    %553 = vmatpush2.msra.mxu0 0.0
    %554 = vmatprep.subr.mxu0 0.0
    %555 = vmatpush2.msra.mxu0 0.0
    %556 = vmatprep.subr.mxu0 0.0
    %557 = vmatpush2.msra.mxu0 0.0
    %558 = vmatprep.subr.mxu0 0.0
    %559 = vmatpush2.msra.mxu0 0.0
    %560 = vmatprep.subr.mxu0 0.0
    %561 = vmatpush2.msra.mxu0 0.0
    %562 = vmatprep.subr.mxu0 0.0
    %563 = vmatpush2.msra.mxu0 0.0
    %564 = vmatprep.subr.mxu0 0.0
    %565 = vmatpush2.msra.mxu0 0.0
    %566 = vmatprep.subr.mxu0 0.0
    %567 = vmatpush2.msra.mxu0 0.0
    %568 = vmatprep.subr.mxu0 0.0
    %569 = vmatpush2.msra.mxu0 0.0
    %570 = vmatprep.subr.mxu0 0.0
    %571 = vmatpush2.msra.mxu0 0.0
    %572 = vmatprep.subr.mxu0 0.0
    %573 = vmatpush2.msra.mxu0 0.0
    %574 = vmatprep.subr.mxu0 0.0
    %575 = vmatpush2.msra.mxu0 0.0
    %576 = vmatprep.subr.mxu0 0.0
    %577 = vmatpush2.msra.mxu0 0.0
    %578 = vmatprep.subr.mxu0 0.0
    %579 = vmatpush2.msra.mxu0 0.0
    %580 = vmatprep.subr.mxu0 0.0
    %581 = vmatpush2.msra.mxu0 0.0
    %582 = vmatprep.mubr.f32.mxu0 0.0
    %583 = vmatmul.mubr.f32.gmra.mxu0 %v507
    %v584 = vpop.f32.mrf.mxu0
    %v585 = vadd.f32 %v489, %v584
    %v586 = vpop.f32.mrf.mxu0
    %v587 = vadd.f32 %v489, %v586
    %588 = vmatprep.mubr.f32.mxu0 0.0
    %589 = vmatmul.mubr.f32.gmra.mxu0 %v510
    %v590 = vpop.f32.mrf.mxu0
    %v591 = vadd.f32 %v494, %v590
    %v592 = vpop.f32.mrf.mxu0
    %v593 = vadd.f32 %v494, %v592
    %594 = vmatprep.mubr.f32.mxu0 0.0
    %595 = vmatmul.mubr.f32.gmra.mxu0 %v513
    %v596 = vpop.f32.mrf.mxu0
    %v597 = vadd.f32 %v499, %v596
    %v598 = vpop.f32.mrf.mxu0
    %v599 = vadd.f32 %v499, %v598
    %600 = vmatprep.mubr.f32.mxu0 0.0
    %601 = vmatmul.mubr.f32.gmra.mxu0 %v516
    %v602 = vpop.f32.mrf.mxu0
    %v603 = vadd.f32 %v504, %v602
    %v604 = vpop.f32.mrf.mxu0
    %v605 = vadd.f32 %v504, %v604
    %606 = vdwg.mxu0
    %607 = vmatprep.subr.mxu0 0.0
    %608 = vmatpush1.msra.mxu0 0.0
    %609 = vmatprep.subr.mxu0 0.0
    %610 = vmatpush1.msra.mxu0 0.0
    %611 = vmatprep.subr.mxu0 0.0
    %612 = vmatpush1.msra.mxu0 0.0
    %613 = vmatprep.subr.mxu0 0.0
    %614 = vmatpush1.msra.mxu0 0.0
    %615 = vmatprep.subr.mxu0 0.0
    %616 = vmatpush1.msra.mxu0 0.0
    %617 = vmatprep.subr.mxu0 0.0
    %618 = vmatpush1.msra.mxu0 0.0
    %619 = vmatprep.subr.mxu0 0.0
    %620 = vmatpush1.msra.mxu0 0.0
    %621 = vmatprep.subr.mxu0 0.0
    %622 = vmatpush1.msra.mxu0 0.0
    %623 = vmatprep.subr.mxu0 0.0
    %624 = vmatpush1.msra.mxu0 0.0
    %625 = vmatprep.subr.mxu0 0.0
    %626 = vmatpush1.msra.mxu0 0.0
    %627 = vmatprep.subr.mxu0 0.0
    %628 = vmatpush1.msra.mxu0 0.0
    %629 = vmatprep.subr.mxu0 0.0
    %630 = vmatpush1.msra.mxu0 0.0
    %631 = vmatprep.subr.mxu0 %v481
    %632 = vmatpush1.msra.mxu0 %v480
    %633 = vmatprep.subr.mxu0 %v477
    %634 = vmatpush1.msra.mxu0 %v476
    %635 = vmatprep.subr.mxu0 %v473
    %636 = vmatpush1.msra.mxu0 %v472
    %637 = vmatprep.subr.mxu0 %v469
    %638 = vmatpush1.msra.mxu0 %v468
    %639 = vmatprep.subr.mxu0 0.0
    %640 = vmatpush2.msra.mxu0 0.0
    %641 = vmatprep.subr.mxu0 0.0
    %642 = vmatpush2.msra.mxu0 0.0
    %643 = vmatprep.subr.mxu0 0.0
    %644 = vmatpush2.msra.mxu0 0.0
    %645 = vmatprep.subr.mxu0 0.0
    %646 = vmatpush2.msra.mxu0 0.0
    %647 = vmatprep.subr.mxu0 0.0
    %648 = vmatpush2.msra.mxu0 0.0
    %649 = vmatprep.subr.mxu0 0.0
    %650 = vmatpush2.msra.mxu0 0.0
    %651 = vmatprep.subr.mxu0 0.0
    %652 = vmatpush2.msra.mxu0 0.0
    %653 = vmatprep.subr.mxu0 0.0
    %654 = vmatpush2.msra.mxu0 0.0
    %655 = vmatprep.subr.mxu0 0.0
    %656 = vmatpush2.msra.mxu0 0.0
    %657 = vmatprep.subr.mxu0 0.0
    %658 = vmatpush2.msra.mxu0 0.0
    %659 = vmatprep.subr.mxu0 0.0
    %660 = vmatpush2.msra.mxu0 0.0
    %661 = vmatprep.subr.mxu0 0.0
    %662 = vmatpush2.msra.mxu0 0.0
    %663 = vmatprep.subr.mxu0 0.0
    %664 = vmatpush2.msra.mxu0 0.0
    %665 = vmatprep.subr.mxu0 0.0
    %666 = vmatpush2.msra.mxu0 0.0
    %667 = vmatprep.subr.mxu0 0.0
    %668 = vmatpush2.msra.mxu0 0.0
    %669 = vmatprep.subr.mxu0 0.0
    %670 = vmatpush2.msra.mxu0 0.0
    %671 = vmatprep.mubr.f32.mxu0 0.0
    %672 = vmatmul.mubr.f32.gmra.mxu0 %v507
    %v673 = vpop.f32.mrf.mxu0
    %v674 = vadd.f32 %v489, %v673
    %v675 = vpop.f32.mrf.mxu0
    %v676 = vadd.f32 %v489, %v675
    %677 = vmatprep.mubr.f32.mxu0 0.0
    %678 = vmatmul.mubr.f32.gmra.mxu0 %v510
    %v679 = vpop.f32.mrf.mxu0
    %v680 = vadd.f32 %v494, %v679
    %v681 = vpop.f32.mrf.mxu0
    %v682 = vadd.f32 %v494, %v681
    %683 = vmatprep.mubr.f32.mxu0 0.0
    %684 = vmatmul.mubr.f32.gmra.mxu0 %v513
    %v685 = vpop.f32.mrf.mxu0
    %v686 = vadd.f32 %v499, %v685
    %v687 = vpop.f32.mrf.mxu0
    %v688 = vadd.f32 %v499, %v687
    %689 = vmatprep.mubr.f32.mxu0 0.0
    %690 = vmatmul.mubr.f32.gmra.mxu0 %v516
    %v691 = vpop.f32.mrf.mxu0
    %v692 = vadd.f32 %v504, %v691
    %v693 = vpop.f32.mrf.mxu0
    %v694 = vadd.f32 %v504, %v693
    %695 = vdwg.mxu0
    %v696 = vmax.f32 %v585, 0.0
    %v697 = vmax.f32 %v587, 0.0
    %v698 = vmax.f32 %v674, 0.0
    %v699 = vmax.f32 %v676, 0.0
    %v700 = vmax.f32 %v591, 0.0
    %v701 = vmax.f32 %v593, 0.0
    %v702 = vmax.f32 %v680, 0.0
    %v703 = vmax.f32 %v682, 0.0
    %v704 = vmax.f32 %v597, 0.0
    %v705 = vmax.f32 %v599, 0.0
    %v706 = vmax.f32 %v686, 0.0
    %v707 = vmax.f32 %v688, 0.0
    %v708 = vmax.f32 %v603, 0.0
    %v709 = vmax.f32 %v605, 0.0
    %v710 = vmax.f32 %v692, 0.0
    %v711 = vmax.f32 %v694, 0.0
    %v712 = vld [vmem:[%s3] sm:$0x3]
    %v713 = vld [vmem:[%s4] sm:$0x3]
    %715 = vset.pattern.permute.xlu0 0
    %716 = vperm.xlu0 %715, %v713
    %v717 = vpop.permute.xlu0 %716
    %v720 = vsel %vm79, %v712, 0
    %722 = vmatprep.subr.mxu0 0.0
    %723 = vmatpush1.msra.mxu0 0.0
    %724 = vmatprep.subr.mxu0 0.0
    %725 = vmatpush1.msra.mxu0 0.0
    %726 = vmatprep.subr.mxu0 0.0
    %727 = vmatpush1.msra.mxu0 0.0
    %728 = vmatprep.subr.mxu0 0.0
    %729 = vmatpush1.msra.mxu0 0.0
    %730 = vmatprep.subr.mxu0 0.0
    %731 = vmatpush1.msra.mxu0 0.0
    %732 = vmatprep.subr.mxu0 0.0
    %733 = vmatpush1.msra.mxu0 0.0
    %734 = vmatprep.subr.mxu0 0.0
    %735 = vmatpush1.msra.mxu0 0.0
    %736 = vmatprep.subr.mxu0 0.0
    %737 = vmatpush1.msra.mxu0 0.0
    %738 = vmatprep.subr.mxu0 0.0
    %739 = vmatpush1.msra.mxu0 0.0
    %740 = vmatprep.subr.mxu0 0.0
    %741 = vmatpush1.msra.mxu0 0.0
    %742 = vmatprep.subr.mxu0 0.0
    %743 = vmatpush1.msra.mxu0 0.0
    %744 = vmatprep.subr.mxu0 0.0
    %745 = vmatpush1.msra.mxu0 0.0
    %746 = vmatprep.subr.mxu0 %v709
    %747 = vmatpush1.msra.mxu0 %v708
    %748 = vmatprep.subr.mxu0 %v705
    %749 = vmatpush1.msra.mxu0 %v704
    %750 = vmatprep.subr.mxu0 %v701
    %751 = vmatpush1.msra.mxu0 %v700
    %752 = vmatprep.subr.mxu0 %v697
    %753 = vmatpush1.msra.mxu0 %v696
    %754 = vmatprep.subr.mxu0 0.0
    %755 = vmatpush2.msra.mxu0 0.0
    %756 = vmatprep.subr.mxu0 0.0
    %757 = vmatpush2.msra.mxu0 0.0
    %758 = vmatprep.subr.mxu0 0.0
    %759 = vmatpush2.msra.mxu0 0.0
    %760 = vmatprep.subr.mxu0 0.0
    %761 = vmatpush2.msra.mxu0 0.0
    %762 = vmatprep.subr.mxu0 0.0
    %763 = vmatpush2.msra.mxu0 0.0
    %764 = vmatprep.subr.mxu0 0.0
    %765 = vmatpush2.msra.mxu0 0.0
    %766 = vmatprep.subr.mxu0 0.0
    %767 = vmatpush2.msra.mxu0 0.0
    %768 = vmatprep.subr.mxu0 0.0
    %769 = vmatpush2.msra.mxu0 0.0
    %770 = vmatprep.subr.mxu0 0.0
    %771 = vmatpush2.msra.mxu0 0.0
    %772 = vmatprep.subr.mxu0 0.0
    %773 = vmatpush2.msra.mxu0 0.0
    %774 = vmatprep.subr.mxu0 0.0
    %775 = vmatpush2.msra.mxu0 0.0
    %776 = vmatprep.subr.mxu0 0.0
    %777 = vmatpush2.msra.mxu0 0.0
    %778 = vmatprep.subr.mxu0 0.0
    %779 = vmatpush2.msra.mxu0 0.0
    %780 = vmatprep.subr.mxu0 0.0
    %781 = vmatpush2.msra.mxu0 0.0
    %782 = vmatprep.subr.mxu0 0.0
    %783 = vmatpush2.msra.mxu0 0.0
    %784 = vmatprep.subr.mxu0 0.0
    %785 = vmatpush2.msra.mxu0 0.0
    %786 = vmatprep.mubr.f32.mxu0 0.0
    %787 = vmatmul.mubr.f32.gmra.mxu0 %v720
    %v788 = vpop.f32.mrf.mxu0
    %v789 = vadd.f32 %v717, %v788
    %v790 = vpop.f32.mrf.mxu0
    %v791 = vadd.f32 %v717, %v790
    %792 = vdwg.mxu0
    %793 = vmatprep.subr.mxu0 0.0
    %794 = vmatpush1.msra.mxu0 0.0
    %795 = vmatprep.subr.mxu0 0.0
    %796 = vmatpush1.msra.mxu0 0.0
    %797 = vmatprep.subr.mxu0 0.0
    %798 = vmatpush1.msra.mxu0 0.0
    %799 = vmatprep.subr.mxu0 0.0
    %800 = vmatpush1.msra.mxu0 0.0
    %801 = vmatprep.subr.mxu0 0.0
    %802 = vmatpush1.msra.mxu0 0.0
    %803 = vmatprep.subr.mxu0 0.0
    %804 = vmatpush1.msra.mxu0 0.0
    %805 = vmatprep.subr.mxu0 0.0
    %806 = vmatpush1.msra.mxu0 0.0
    %807 = vmatprep.subr.mxu0 0.0
    %808 = vmatpush1.msra.mxu0 0.0
    %809 = vmatprep.subr.mxu0 0.0
    %810 = vmatpush1.msra.mxu0 0.0
    %811 = vmatprep.subr.mxu0 0.0
    %812 = vmatpush1.msra.mxu0 0.0
    %813 = vmatprep.subr.mxu0 0.0
    %814 = vmatpush1.msra.mxu0 0.0
    %815 = vmatprep.subr.mxu0 0.0
    %816 = vmatpush1.msra.mxu0 0.0
    %817 = vmatprep.subr.mxu0 %v711
    %818 = vmatpush1.msra.mxu0 %v710
    %819 = vmatprep.subr.mxu0 %v707
    %820 = vmatpush1.msra.mxu0 %v706
    %821 = vmatprep.subr.mxu0 %v703
    %822 = vmatpush1.msra.mxu0 %v702
    %823 = vmatprep.subr.mxu0 %v699
    %824 = vmatpush1.msra.mxu0 %v698
    %825 = vmatprep.subr.mxu0 0.0
    %826 = vmatpush2.msra.mxu0 0.0
    %827 = vmatprep.subr.mxu0 0.0
    %828 = vmatpush2.msra.mxu0 0.0
    %829 = vmatprep.subr.mxu0 0.0
    %830 = vmatpush2.msra.mxu0 0.0
    %831 = vmatprep.subr.mxu0 0.0
    %832 = vmatpush2.msra.mxu0 0.0
    %833 = vmatprep.subr.mxu0 0.0
    %834 = vmatpush2.msra.mxu0 0.0
    %835 = vmatprep.subr.mxu0 0.0
    %836 = vmatpush2.msra.mxu0 0.0
    %837 = vmatprep.subr.mxu0 0.0
    %838 = vmatpush2.msra.mxu0 0.0
    %839 = vmatprep.subr.mxu0 0.0
    %840 = vmatpush2.msra.mxu0 0.0
    %841 = vmatprep.subr.mxu0 0.0
    %842 = vmatpush2.msra.mxu0 0.0
    %843 = vmatprep.subr.mxu0 0.0
    %844 = vmatpush2.msra.mxu0 0.0
    %845 = vmatprep.subr.mxu0 0.0
    %846 = vmatpush2.msra.mxu0 0.0
    %847 = vmatprep.subr.mxu0 0.0
    %848 = vmatpush2.msra.mxu0 0.0
    %849 = vmatprep.subr.mxu0 0.0
    %850 = vmatpush2.msra.mxu0 0.0
    %851 = vmatprep.subr.mxu0 0.0
    %852 = vmatpush2.msra.mxu0 0.0
    %853 = vmatprep.subr.mxu0 0.0
    %854 = vmatpush2.msra.mxu0 0.0
    %855 = vmatprep.subr.mxu0 0.0
    %856 = vmatpush2.msra.mxu0 0.0
    %857 = vmatprep.mubr.f32.mxu0 0.0
    %858 = vmatmul.mubr.f32.gmra.mxu0 %v720
    %v859 = vpop.f32.mrf.mxu0
    %v860 = vadd.f32 %v717, %v859
    %v861 = vpop.f32.mrf.mxu0
    %v862 = vadd.f32 %v717, %v861
    %863 = vdwg.mxu0
    %v868 = vcombine.low %v789, %v791
    %v869 = vcombine.low %v860, %v862
    %v871 = vunpack.c.l.s4 1983009808
    %v872 = vunpack.c.0.s8 %v871
    %v873 = vlaneseq
    %v874 = vshrl.u32 %v873, 7
    %v875 = vsub.s32 %v872, %v874
    %v876 = vrot.slane %v868, %v875
    %v878 = vunpack.c.l.s4 1983009808
    %v879 = vunpack.c.0.s8 %v878
    %v880 = vlaneseq
    %v881 = vshrl.u32 %v880, 7
    %v882 = vsub.s32 %v879, %v881
    %v883 = vrot.slane %v869, %v882
    %v884 = vcombine.low %v876, %v883
    %s886 = scalar_lea.vmem [#allocation5], 8
    %887 = vst [vmem:[%s886] sm:$0xff] %v884
    // Predicated region
    $region26: #{tpu_custom_call.1} parent=1 // pred_check
      _
    $region27: #{tpu_custom_call.1} parent=1 // pred_check_branch
      %889 = sbr.rel (0) target = $region29
    $region28: #{tpu_custom_call.1} parent=1 // pred_region
      %s891 = ssub.s32 256, 256
      %892 = vsyncadd [#allocation4], %s891
      %s893 = sshll.u32 [#allocation5], 4
      %s894 = int_to_ptr.vmem [resolvable:$true] %s893
      %899 = dma.vmem_to_hbm [thread:$0]  %s894, 256, %s5, [#allocation4], 128, 128, 8
    $region29: #{tpu_custom_call.1} parent=1 // pred_fallthru
      _
    // Predicated region
    $region30: #{tpu_custom_call.1} parent=1 // pred_check
      _
    $region31: #{tpu_custom_call.1} parent=1 // pred_check_branch
      %901 = sbr.rel (0) target = $region33
    $region32: #{tpu_custom_call.1} parent=1 // pred_region
      %902 = dma.done [#allocation4], 256
    $region33: #{tpu_custom_call.1} parent=1 // pred_fallthru
      _
    %903 = vsyncpa [#allocation3], 1
    %904 = vsyncpa [#allocation4], 1

</llo_original>
